<compile_context>
chip_gen: v7x
topology: tpu7x:2x2x1
jax: 0.10.0
libtpu: 0.0.40
codegen_flags: <defaults>
</compile_context>

<pallas_src>
import functools

import jax
import jax.numpy as jnp
from jax.experimental import pallas as pl
from jax.experimental.pallas import tpu as pltpu

BN_EPS = 1e-5


def _round_up(x, m):
    return ((x + m - 1) // m) * m


def mlp_kernel(x_ref, scale_ref, shift_ref,
               w1_ref, b1_ref, w2_ref, b2_ref, w3_ref, b3_ref,
               o_ref):
    # Folded BatchNorm: one FMA per element, all f32.
    x = x_ref[...].astype(jnp.float32)
    xn = x * scale_ref[...] + shift_ref[...]

    mm = w1_ref.dtype  # matmul feed dtype (bf16 by default)

    # fc1 + ReLU  (bf16-fed MXU, f32 accumulate, f32 elementwise)
    h1 = jnp.dot(xn.astype(mm), w1_ref[...],
                 preferred_element_type=jnp.float32) + b1_ref[...]
    h1 = jnp.maximum(h1, 0.0)

    # fc2 + ReLU
    h2 = jnp.dot(h1.astype(mm), w2_ref[...],
                 preferred_element_type=jnp.float32) + b2_ref[...]
    h2 = jnp.maximum(h2, 0.0)

    # fc3 (out_fn is identity); w3/b3 are zero-padded to a 128-lane-dense block
    h3 = jnp.dot(h2.astype(mm), w3_ref[...],
                 preferred_element_type=jnp.float32) + b3_ref[...]

    o_ref[...] = h3.astype(o_ref.dtype)


@functools.partial(jax.jit, static_argnames=("tile_b", "matmul_dtype"))
def mlp_network_forward(x, params, *, tile_b=256, matmul_dtype=jnp.bfloat16):
    """x: (B, input_dim) float32. params: dict of arrays (see init_params)."""
    B, input_dim = x.shape
    hidden_dim = params["w1"].shape[1]
    out_dim = params["w3"].shape[1]

    x32 = x.astype(jnp.float32)

    # --- BatchNorm1d training-mode stats over the FULL batch, folded into
    #     per-feature scale/shift (keeps semantics under batch tiling).
    mean = jnp.mean(x32, axis=0, keepdims=True)
    var = jnp.mean(jnp.square(x32 - mean), axis=0, keepdims=True)  # biased
    scale = (params["bn_gamma"] * jax.lax.rsqrt(var + BN_EPS)).astype(jnp.float32)
    shift = (params["bn_beta"] - mean * scale).astype(jnp.float32)

    # --- kernel-ready weights: bf16 for the MXU, fc3 padded lane-dense (x128)
    out_pad = _round_up(out_dim, 128)
    w1 = params["w1"].astype(matmul_dtype)
    w2 = params["w2"].astype(matmul_dtype)
    w3 = jnp.zeros((hidden_dim, out_pad), matmul_dtype).at[:, :out_dim].set(
        params["w3"].astype(matmul_dtype))
    b1 = params["b1"].astype(jnp.float32)
    b2 = params["b2"].astype(jnp.float32)
    b3 = jnp.zeros((1, out_pad), jnp.float32).at[:, :out_dim].set(
        params["b3"].astype(jnp.float32))

    # --- batch tiling: pad B to a multiple of the (sublane-aligned) tile
    tb = min(tile_b, _round_up(B, 8))
    b_pad = _round_up(B, tb)
    if b_pad != B:
        x32 = jnp.pad(x32, ((0, b_pad - B), (0, 0)))
    grid = (b_pad // tb,)

    vmem = pltpu.MemorySpace.VMEM

    def tiled(shape):
        return pl.BlockSpec(shape, lambda i: (i, 0), memory_space=vmem)

    def resident(shape):
        return pl.BlockSpec(shape, lambda i: (0, 0), memory_space=vmem)

    in_specs = [
        tiled((tb, input_dim)),              # x (batch-tiled, pipelined)
        resident((1, input_dim)),            # BN scale
        resident((1, input_dim)),            # BN shift
        resident((input_dim, hidden_dim)),   # w1
        resident((1, hidden_dim)),           # b1
        resident((hidden_dim, hidden_dim)),  # w2
        resident((1, hidden_dim)),           # b2
        resident((hidden_dim, out_pad)),     # w3 (lane-dense padded)
        resident((1, out_pad)),              # b3 (lane-dense padded)
    ]
    out_spec = tiled((tb, out_pad))

    out_padded = pl.pallas_call(
        mlp_kernel,
        out_shape=jax.ShapeDtypeStruct((b_pad, out_pad), jnp.float32),
        grid=grid,
        in_specs=in_specs,
        out_specs=out_spec,
        compiler_params=pltpu.CompilerParams(
            dimension_semantics=("parallel",),     # megacore batch sharding
            vmem_limit_bytes=32 * 1024 * 1024,     # safe on v5e/v6e/v7x
        ),
    )(x32, scale, shift, w1, b1, w2, b2, w3, b3)

    return out_padded[:B, :out_dim]


def init_params(key, input_dim, out_dim, hidden_dim):
    """nn.Linear default init (U[-1/sqrt(fan_in), 1/sqrt(fan_in)]) and
    BatchNorm1d weight=1, bias=0. Weights stored as (in, out) = W.T."""
    ks = jax.random.split(key, 6)

    def linear(kw, kb, fan_in, fan_out):
        bound = 1.0 / jnp.sqrt(fan_in)
        w = jax.random.uniform(kw, (fan_in, fan_out), jnp.float32, -bound, bound)
        b = jax.random.uniform(kb, (1, fan_out), jnp.float32, -bound, bound)
        return w, b

    w1, b1 = linear(ks[0], ks[1], input_dim, hidden_dim)
    w2, b2 = linear(ks[2], ks[3], hidden_dim, hidden_dim)
    w3, b3 = linear(ks[4], ks[5], hidden_dim, out_dim)
    return dict(
        bn_gamma=jnp.ones((1, input_dim), jnp.float32),
        bn_beta=jnp.zeros((1, input_dim), jnp.float32),
        w1=w1, b1=b1, w2=w2, b2=b2, w3=w3, b3=b3,
    )


def reference_forward(x, p, matmul_dtype=jnp.bfloat16):
    """Pure-JAX reference with the same folded-BN and bf16-fed-MXU numerics."""
    x = x.astype(jnp.float32)
    mean = jnp.mean(x, axis=0, keepdims=True)
    var = jnp.mean(jnp.square(x - mean), axis=0, keepdims=True)
    scale = p["bn_gamma"] * jax.lax.rsqrt(var + BN_EPS)
    shift = p["bn_beta"] - mean * scale
    xn = x * scale + shift

    def lin(h, w, b):
        return jnp.dot(h.astype(matmul_dtype), w.astype(matmul_dtype),
                       preferred_element_type=jnp.float32) + b

    h1 = jnp.maximum(lin(xn, p["w1"], p["b1"]), 0.0)
    h2 = jnp.maximum(lin(h1, p["w2"], p["b2"]), 0.0)
    return lin(h2, p["w3"], p["b3"])


if __name__ == "__main__":
    batch, input_dim, hidden_dim, out_dim = 8, 16, 32, 8

    key = jax.random.PRNGKey(0)
    k_x, k_p = jax.random.split(key)
    x = jax.random.normal(k_x, (batch, input_dim), jnp.float32)
    params = init_params(k_p, input_dim, out_dim, hidden_dim)

    out = mlp_network_forward(x, params)
    out = jax.block_until_ready(out)

    ref = reference_forward(x, params)
    assert out.shape == (batch, out_dim)
    max_err = float(jnp.max(jnp.abs(out - ref)))
    assert jnp.allclose(out, ref, atol=1e-3, rtol=1e-3), max_err

    print("KERNEL_OK")
</pallas_src>

<mosaic_0001>
module attributes {stable_mosaic.version = 11 : i64} {
  func.func @mlp_kernel(%arg0: i32, %arg1: memref<8x16xf32, #tpu.memory_space<vmem>>, %arg2: memref<1x16xf32, #tpu.memory_space<vmem>>, %arg3: memref<1x16xf32, #tpu.memory_space<vmem>>, %arg4: memref<16x32xbf16, #tpu.memory_space<vmem>>, %arg5: memref<1x32xf32, #tpu.memory_space<vmem>>, %arg6: memref<32x32xbf16, #tpu.memory_space<vmem>>, %arg7: memref<1x32xf32, #tpu.memory_space<vmem>>, %arg8: memref<32x128xbf16, #tpu.memory_space<vmem>>, %arg9: memref<1x128xf32, #tpu.memory_space<vmem>>, %arg10: memref<8x128xf32, #tpu.memory_space<vmem>>) attributes {dimension_semantics = [#tpu.dimension_semantics<parallel>], iteration_bounds = array<i64: 1>, scalar_prefetch = 0 : i64, scratch_operands = 0 : i64, tpu.core_type = #tpu.core_type<tc>, window_params = [{transform_indices = @transform_0, window_bounds = array<i64: 8, 16>}, {pipeline_mode = #tpu.pipeline_mode<synchronous>, transform_indices = @transform_1, window_bounds = array<i64: 1, 16>}, {pipeline_mode = #tpu.pipeline_mode<synchronous>, transform_indices = @transform_2, window_bounds = array<i64: 1, 16>}, {pipeline_mode = #tpu.pipeline_mode<synchronous>, transform_indices = @transform_3, window_bounds = array<i64: 16, 32>}, {pipeline_mode = #tpu.pipeline_mode<synchronous>, transform_indices = @transform_4, window_bounds = array<i64: 1, 32>}, {pipeline_mode = #tpu.pipeline_mode<synchronous>, transform_indices = @transform_5, window_bounds = array<i64: 32, 32>}, {pipeline_mode = #tpu.pipeline_mode<synchronous>, transform_indices = @transform_6, window_bounds = array<i64: 1, 32>}, {pipeline_mode = #tpu.pipeline_mode<synchronous>, transform_indices = @transform_7, window_bounds = array<i64: 32, 128>}, {pipeline_mode = #tpu.pipeline_mode<synchronous>, transform_indices = @transform_8, window_bounds = array<i64: 1, 128>}, {transform_indices = @transform_9, window_bounds = array<i64: 8, 128>}]} {
    %c0 = arith.constant 0 : index
    %c0_0 = arith.constant 0 : index
    %0 = vector.load %arg1[%c0, %c0_0] : memref<8x16xf32, #tpu.memory_space<vmem>>, vector<8x16xf32>
    %c0_1 = arith.constant 0 : index
    %c0_2 = arith.constant 0 : index
    %1 = vector.load %arg2[%c0_1, %c0_2] : memref<1x16xf32, #tpu.memory_space<vmem>>, vector<1x16xf32>
    %2 = vector.broadcast %1 : vector<1x16xf32> to vector<8x16xf32>
    %3 = arith.mulf %0, %2 : vector<8x16xf32>
    %c0_3 = arith.constant 0 : index
    %c0_4 = arith.constant 0 : index
    %4 = vector.load %arg3[%c0_3, %c0_4] : memref<1x16xf32, #tpu.memory_space<vmem>>, vector<1x16xf32>
    %5 = vector.broadcast %4 : vector<1x16xf32> to vector<8x16xf32>
    %6 = arith.addf %3, %5 : vector<8x16xf32>
    %7 = arith.truncf %6 : vector<8x16xf32> to vector<8x16xbf16>
    %c0_5 = arith.constant 0 : index
    %c0_6 = arith.constant 0 : index
    %8 = vector.load %arg4[%c0_5, %c0_6] : memref<16x32xbf16, #tpu.memory_space<vmem>>, vector<16x32xbf16>
    %cst = arith.constant dense<0.000000e+00> : vector<8x32xf32>
    %9 = tpu.matmul %7, %8, %cst {dimension_numbers = #tpu.dot_dimension_numbers<[1], [0], [0], [1], [0, 0, 1, 1], [], []>} : vector<8x16xbf16>, vector<16x32xbf16>, vector<8x32xf32> -> vector<8x32xf32>
    %c0_7 = arith.constant 0 : index
    %c0_8 = arith.constant 0 : index
    %10 = vector.load %arg5[%c0_7, %c0_8] : memref<1x32xf32, #tpu.memory_space<vmem>>, vector<1x32xf32>
    %11 = vector.broadcast %10 : vector<1x32xf32> to vector<8x32xf32>
    %12 = arith.addf %9, %11 : vector<8x32xf32>
    %cst_9 = arith.constant 0.000000e+00 : f32
    %13 = vector.broadcast %cst_9 : f32 to vector<8x32xf32>
    %14 = arith.maximumf %12, %13 : vector<8x32xf32>
    %15 = arith.truncf %14 : vector<8x32xf32> to vector<8x32xbf16>
    %c0_10 = arith.constant 0 : index
    %c0_11 = arith.constant 0 : index
    %16 = vector.load %arg6[%c0_10, %c0_11] : memref<32x32xbf16, #tpu.memory_space<vmem>>, vector<32x32xbf16>
    %cst_12 = arith.constant dense<0.000000e+00> : vector<8x32xf32>
    %17 = tpu.matmul %15, %16, %cst_12 {dimension_numbers = #tpu.dot_dimension_numbers<[1], [0], [0], [1], [0, 0, 1, 1], [], []>} : vector<8x32xbf16>, vector<32x32xbf16>, vector<8x32xf32> -> vector<8x32xf32>
    %c0_13 = arith.constant 0 : index
    %c0_14 = arith.constant 0 : index
    %18 = vector.load %arg7[%c0_13, %c0_14] : memref<1x32xf32, #tpu.memory_space<vmem>>, vector<1x32xf32>
    %19 = vector.broadcast %18 : vector<1x32xf32> to vector<8x32xf32>
    %20 = arith.addf %17, %19 : vector<8x32xf32>
    %cst_15 = arith.constant 0.000000e+00 : f32
    %21 = vector.broadcast %cst_15 : f32 to vector<8x32xf32>
    %22 = arith.maximumf %20, %21 : vector<8x32xf32>
    %23 = arith.truncf %22 : vector<8x32xf32> to vector<8x32xbf16>
    %c0_16 = arith.constant 0 : index
    %c0_17 = arith.constant 0 : index
    %24 = vector.load %arg8[%c0_16, %c0_17] : memref<32x128xbf16, #tpu.memory_space<vmem>>, vector<32x128xbf16>
    %cst_18 = arith.constant dense<0.000000e+00> : vector<8x128xf32>
    %25 = tpu.matmul %23, %24, %cst_18 {dimension_numbers = #tpu.dot_dimension_numbers<[1], [0], [0], [1], [0, 0, 1, 1], [], []>} : vector<8x32xbf16>, vector<32x128xbf16>, vector<8x128xf32> -> vector<8x128xf32>
    %c0_19 = arith.constant 0 : index
    %c0_20 = arith.constant 0 : index
    %26 = vector.load %arg9[%c0_19, %c0_20] : memref<1x128xf32, #tpu.memory_space<vmem>>, vector<1x128xf32>
    %27 = vector.broadcast %26 : vector<1x128xf32> to vector<8x128xf32>
    %28 = arith.addf %25, %27 : vector<8x128xf32>
    %c0_21 = arith.constant 0 : index
    %c0_22 = arith.constant 0 : index
    %29 = vector.load %arg10[%c0_21, %c0_22] : memref<8x128xf32, #tpu.memory_space<vmem>>, vector<8x128xf32>
    tpu.vector_store %arg10[%c0_21, %c0_22], %28 {strides = array<i32>} : memref<8x128xf32, #tpu.memory_space<vmem>>, vector<8x128xf32>,
    return
  }
  func.func @transform_0(%arg0: i32) -> (i32, i32) {
    %c0_i32 = arith.constant 0 : i32
    %c0_i32_0 = arith.constant 0 : i32
    return %arg0, %c0_i32 : i32, i32
  }
  func.func @transform_1(%arg0: i32) -> (i32, i32) {
    %c0_i32 = arith.constant 0 : i32
    %c0_i32_0 = arith.constant 0 : i32
    %c0_i32_1 = arith.constant 0 : i32
    return %c0_i32, %c0_i32_0 : i32, i32
  }
  func.func @transform_2(%arg0: i32) -> (i32, i32) {
    %c0_i32 = arith.constant 0 : i32
    %c0_i32_0 = arith.constant 0 : i32
    %c0_i32_1 = arith.constant 0 : i32
    return %c0_i32, %c0_i32_0 : i32, i32
  }
  func.func @transform_3(%arg0: i32) -> (i32, i32) {
    %c0_i32 = arith.constant 0 : i32
    %c0_i32_0 = arith.constant 0 : i32
    %c0_i32_1 = arith.constant 0 : i32
    return %c0_i32, %c0_i32_0 : i32, i32
  }
  func.func @transform_4(%arg0: i32) -> (i32, i32) {
    %c0_i32 = arith.constant 0 : i32
    %c0_i32_0 = arith.constant 0 : i32
    %c0_i32_1 = arith.constant 0 : i32
    return %c0_i32, %c0_i32_0 : i32, i32
  }
  func.func @transform_5(%arg0: i32) -> (i32, i32) {
    %c0_i32 = arith.constant 0 : i32
    %c0_i32_0 = arith.constant 0 : i32
    %c0_i32_1 = arith.constant 0 : i32
    return %c0_i32, %c0_i32_0 : i32, i32
  }
  func.func @transform_6(%arg0: i32) -> (i32, i32) {
    %c0_i32 = arith.constant 0 : i32
    %c0_i32_0 = arith.constant 0 : i32
    %c0_i32_1 = arith.constant 0 : i32
    return %c0_i32, %c0_i32_0 : i32, i32
  }
  func.func @transform_7(%arg0: i32) -> (i32, i32) {
    %c0_i32 = arith.constant 0 : i32
    %c0_i32_0 = arith.constant 0 : i32
    %c0_i32_1 = arith.constant 0 : i32
    return %c0_i32, %c0_i32_0 : i32, i32
  }
  func.func @transform_8(%arg0: i32) -> (i32, i32) {
    %c0_i32 = arith.constant 0 : i32
    %c0_i32_0 = arith.constant 0 : i32
    %c0_i32_1 = arith.constant 0 : i32
    return %c0_i32, %c0_i32_0 : i32, i32
  }
  func.func @transform_9(%arg0: i32) -> (i32, i32) {
    %c0_i32 = arith.constant 0 : i32
    %c0_i32_0 = arith.constant 0 : i32
    return %arg0, %c0_i32 : i32, i32
  }
}

</mosaic_0001>

<llo_original>
// kernel: mlp_network_forward.1
$region0: #{mlp_network_forward.1}
  #allocation0 [shape = 'u32[]', space=smem, size = 0x4, offset = 0x4, fixed_abs, tag = 'smem constant byte address 0x4 - core index']
  #allocation1 [shape = 'u32[144,128]{1,0:T(1,128)}', space=vmem, size = 0x12000, scoped, tag = 'internal scratch']
  %s0 = inlined_call_operand.vmem [shape: f32[8,16], index: 0, kind: input, shape index: {}]
  %s1 = inlined_call_operand.vmem [shape: f32[1,16], index: 1, kind: input, shape index: {}]
  %s2 = inlined_call_operand.vmem [shape: f32[1,16], index: 2, kind: input, shape index: {}]
  %s3 = inlined_call_operand.vmem [shape: bf16[16,32], index: 3, kind: input, shape index: {}]
  %s4 = inlined_call_operand.vmem [shape: f32[1,32], index: 4, kind: input, shape index: {}]
  %s5 = inlined_call_operand.vmem [shape: bf16[32,32], index: 5, kind: input, shape index: {}]
  %s6 = inlined_call_operand.vmem [shape: f32[1,32], index: 6, kind: input, shape index: {}]
  %s7 = inlined_call_operand.vmem [shape: bf16[32,128], index: 7, kind: input, shape index: {}]
  %s8 = inlined_call_operand.vmem [shape: f32[1,128], index: 8, kind: input, shape index: {}]
  %s9 = inlined_call_operand.hbm [shape: f32[8,128], index: 9, kind: output, shape index: {}]
  %s10 = sld [smem:[#allocation0]]
  $region46: #{mlp_network_forward.1} parent=0
    _
  %s12 = ssub.s32 1, %s10
  %s13 = scalar_select 0, %s12, %s10
  $region1: #{mlp_network_forward.1} parent=0
    #allocation2 [shape = 'u8[4096]{0}', space=vmem, size = 0x1000, scoped, tag = 'output window, operand 0, single buffered']
    #allocation3 [shape = 's32[1]{0}', space=sflag, size = 0x4, scoped, tag = 'scoped memory for mlp_network_forward.1']
    %14 = vsyncpa [#allocation3], 0
    // Predicated region
    $region2: #{mlp_network_forward.1} parent=1 // pred_check
      _
    $region3: #{mlp_network_forward.1} parent=1 // pred_check_branch
      %16 = sbr.rel (0) target = $region5
    $region4: #{mlp_network_forward.1} parent=1 // pred_region
      _
    $region5: #{mlp_network_forward.1} parent=1 // pred_fallthru
      _
    // Predicated region
    $region6: #{mlp_network_forward.1} parent=1 // pred_check
      _
    $region7: #{mlp_network_forward.1} parent=1 // pred_check_branch
      %18 = sbr.rel (0) target = $region9
    $region8: #{mlp_network_forward.1} parent=1 // pred_region
      _
    $region9: #{mlp_network_forward.1} parent=1 // pred_fallthru
      _
    // Predicated region
    $region10: #{mlp_network_forward.1} parent=1 // pred_check
      _
    $region11: #{mlp_network_forward.1} parent=1 // pred_check_branch
      %20 = sbr.rel (0) target = $region13
    $region12: #{mlp_network_forward.1} parent=1 // pred_region
      _
    $region13: #{mlp_network_forward.1} parent=1 // pred_fallthru
      _
    // Predicated region
    $region14: #{mlp_network_forward.1} parent=1 // pred_check
      _
    $region15: #{mlp_network_forward.1} parent=1 // pred_check_branch
      %22 = sbr.rel (0) target = $region17
    $region16: #{mlp_network_forward.1} parent=1 // pred_region
      _
    $region17: #{mlp_network_forward.1} parent=1 // pred_fallthru
      _
    // Predicated region
    $region18: #{mlp_network_forward.1} parent=1 // pred_check
      _
    $region19: #{mlp_network_forward.1} parent=1 // pred_check_branch
      %24 = sbr.rel (0) target = $region21
    $region20: #{mlp_network_forward.1} parent=1 // pred_region
      _
    $region21: #{mlp_network_forward.1} parent=1 // pred_fallthru
      _
    // Predicated region
    $region22: #{mlp_network_forward.1} parent=1 // pred_check
      _
    $region23: #{mlp_network_forward.1} parent=1 // pred_check_branch
      %26 = sbr.rel (0) target = $region25
    $region24: #{mlp_network_forward.1} parent=1 // pred_region
      _
    $region25: #{mlp_network_forward.1} parent=1 // pred_fallthru
      _
    // Predicated region
    $region26: #{mlp_network_forward.1} parent=1 // pred_check
      _
    $region27: #{mlp_network_forward.1} parent=1 // pred_check_branch
      %28 = sbr.rel (0) target = $region29
    $region28: #{mlp_network_forward.1} parent=1 // pred_region
      _
    $region29: #{mlp_network_forward.1} parent=1 // pred_fallthru
      _
    // Predicated region
    $region30: #{mlp_network_forward.1} parent=1 // pred_check
      _
    $region31: #{mlp_network_forward.1} parent=1 // pred_check_branch
      %30 = sbr.rel (0) target = $region33
    $region32: #{mlp_network_forward.1} parent=1 // pred_region
      _
    $region33: #{mlp_network_forward.1} parent=1 // pred_fallthru
      _
    // Predicated region
    $region34: #{mlp_network_forward.1} parent=1 // pred_check
      _
    $region35: #{mlp_network_forward.1} parent=1 // pred_check_branch
      %32 = sbr.rel (0) target = $region37
    $region36: #{mlp_network_forward.1} parent=1 // pred_region
      _
    $region37: #{mlp_network_forward.1} parent=1 // pred_fallthru
      _
    %v34 = vld [vmem:[%s0] sm:$0xff]
    %v35 = vld [vmem:[%s1] sm:$0x1]
    %v37 = vlaneseq
    %v38 = vshrl.u32 %v37, 7
    %v39 = vsub.s32 0, %v38
    %v40 = vrot.slane %v35, %v39
    %v42 = vmul.f32 %v34, %v40
    %v43 = vld [vmem:[%s2] sm:$0x1]
    %v45 = vlaneseq
    %v46 = vshrl.u32 %v45, 7
    %v47 = vsub.s32 0, %v46
    %v48 = vrot.slane %v43, %v47
    %v50 = vadd.f32 %v42, %v48
    %v51 = vpack.c.bf16 %v50, %v50
    %v52 = vld [vmem:[%s3] sm:$0xf]
    %v53 = vld [vmem:[%s3 + $0x4] sm:$0xf]
    %v54 = vld [vmem:[%s4] sm:$0x1]
    %v56 = vlaneseq
    %v57 = vshrl.u32 %v56, 7
    %v58 = vsub.s32 0, %v57
    %v59 = vrot.slane %v54, %v58
    %v63 = vunpack.c.l.b16 %v52
    %v64 = vunpack.c.l.b16 %v53
    %v65 = vpack.c.b16 %v64, %v63
    %vm67 = vcmask 130048
    %v69 = vsel %vm67, %v51, 0
    %71 = vmatprep.subr.bf16.mxu0 0
    %72 = vmatpush1.bf16.msra.mxu0 %v65
    %73 = vmatprep.subr.bf16.mxu0 0
    %74 = vmatpush1.bf16.msra.mxu0 0
    %75 = vmatprep.subr.bf16.mxu0 0
    %76 = vmatpush1.bf16.msra.mxu0 0
    %77 = vmatprep.subr.bf16.mxu0 0
    %78 = vmatpush1.bf16.msra.mxu0 0
    %79 = vmatprep.subr.bf16.mxu0 0
    %80 = vmatpush1.bf16.msra.mxu0 0
    %81 = vmatprep.subr.bf16.mxu0 0
    %82 = vmatpush1.bf16.msra.mxu0 0
    %83 = vmatprep.subr.bf16.mxu0 0
    %84 = vmatpush1.bf16.msra.mxu0 0
    %85 = vmatprep.subr.bf16.mxu0 0
    %86 = vmatpush1.bf16.msra.mxu0 0
    %87 = vmatprep.subr.bf16.mxu0 0
    %88 = vmatpush1.bf16.msra.mxu0 0
    %89 = vmatprep.subr.bf16.mxu0 0
    %90 = vmatpush1.bf16.msra.mxu0 0
    %91 = vmatprep.subr.bf16.mxu0 0
    %92 = vmatpush1.bf16.msra.mxu0 0
    %93 = vmatprep.subr.bf16.mxu0 0
    %94 = vmatpush1.bf16.msra.mxu0 0
    %95 = vmatprep.subr.bf16.mxu0 0
    %96 = vmatpush1.bf16.msra.mxu0 0
    %97 = vmatprep.subr.bf16.mxu0 0
    %98 = vmatpush1.bf16.msra.mxu0 0
    %99 = vmatprep.subr.bf16.mxu0 0
    %100 = vmatpush1.bf16.msra.mxu0 0
    %101 = vmatprep.subr.bf16.mxu0 0
    %102 = vmatpush1.bf16.msra.mxu0 0
    %103 = vmatprep.mubr.bf16.mxu0 0
    %104 = vmatmul.mubr.bf16.gmra.mrb[0].mxu0 %v69
    %v105 = vpop.f32.mrb[0].mxu0
    %v106 = vadd.f32 %v59, %v105
    %v107 = vpop.f32.mrb[0].mxu0
    %v108 = vpop.f32.mrb[0].mxu0
    %v109 = vpop.f32.mrb[0].mxu0
    %110 = vdwg.mxu0
    %v111 = vmax.f32 %v106, 0.0
    %v112 = vpack.c.bf16 %v111, %v111
    %v113 = vld [vmem:[%s5] sm:$0xf]
    %v114 = vld [vmem:[%s5 + $0x4] sm:$0xf]
    %v115 = vld [vmem:[%s5 + $0x8] sm:$0xf]
    %v116 = vld [vmem:[%s5 + $0xc] sm:$0xf]
    %v117 = vld [vmem:[%s6] sm:$0x1]
    %v119 = vlaneseq
    %v120 = vshrl.u32 %v119, 7
    %v121 = vsub.s32 0, %v120
    %v122 = vrot.slane %v117, %v121
    %v128 = vunpack.c.l.b16 %v113
    %v129 = vunpack.c.l.b16 %v114
    %v130 = vunpack.c.l.b16 %v115
    %v131 = vunpack.c.l.b16 %v116
    %v132 = vpack.c.b16 %v129, %v128
    %v133 = vpack.c.b16 %v131, %v130
    %vm136 = vcmask 261120
    %v138 = vsel %vm136, %v112, 0
    %140 = vmatprep.subr.bf16.mxu0 0
    %141 = vmatpush1.bf16.msra.mxu0 %v132
    %142 = vmatprep.subr.bf16.mxu0 0
    %143 = vmatpush1.bf16.msra.mxu0 %v133
    %144 = vmatprep.subr.bf16.mxu0 0
    %145 = vmatpush1.bf16.msra.mxu0 0
    %146 = vmatprep.subr.bf16.mxu0 0
    %147 = vmatpush1.bf16.msra.mxu0 0
    %148 = vmatprep.subr.bf16.mxu0 0
    %149 = vmatpush1.bf16.msra.mxu0 0
    %150 = vmatprep.subr.bf16.mxu0 0
    %151 = vmatpush1.bf16.msra.mxu0 0
    %152 = vmatprep.subr.bf16.mxu0 0
    %153 = vmatpush1.bf16.msra.mxu0 0
    %154 = vmatprep.subr.bf16.mxu0 0
    %155 = vmatpush1.bf16.msra.mxu0 0
    %156 = vmatprep.subr.bf16.mxu0 0
    %157 = vmatpush1.bf16.msra.mxu0 0
    %158 = vmatprep.subr.bf16.mxu0 0
    %159 = vmatpush1.bf16.msra.mxu0 0
    %160 = vmatprep.subr.bf16.mxu0 0
    %161 = vmatpush1.bf16.msra.mxu0 0
    %162 = vmatprep.subr.bf16.mxu0 0
    %163 = vmatpush1.bf16.msra.mxu0 0
    %164 = vmatprep.subr.bf16.mxu0 0
    %165 = vmatpush1.bf16.msra.mxu0 0
    %166 = vmatprep.subr.bf16.mxu0 0
    %167 = vmatpush1.bf16.msra.mxu0 0
    %168 = vmatprep.subr.bf16.mxu0 0
    %169 = vmatpush1.bf16.msra.mxu0 0
    %170 = vmatprep.subr.bf16.mxu0 0
    %171 = vmatpush1.bf16.msra.mxu0 0
    %172 = vmatprep.mubr.bf16.mxu0 0
    %173 = vmatmul.mubr.bf16.gmra.mrb[0].mxu0 %v138
    %v174 = vpop.f32.mrb[0].mxu0
    %v175 = vadd.f32 %v122, %v174
    %v176 = vpop.f32.mrb[0].mxu0
    %v177 = vpop.f32.mrb[0].mxu0
    %v178 = vpop.f32.mrb[0].mxu0
    %179 = vdwg.mxu0
    %v180 = vmax.f32 %v175, 0.0
    %v181 = vpack.c.bf16 %v180, %v180
    %v182 = vld [vmem:[%s7] sm:$0xf]
    %v183 = vld [vmem:[%s7 + $0x4] sm:$0xf]
    %v184 = vld [vmem:[%s7 + $0x8] sm:$0xf]
    %v185 = vld [vmem:[%s7 + $0xc] sm:$0xf]
    %v186 = vld [vmem:[%s8] sm:$0x1]
    %v188 = vlaneseq
    %v189 = vshrl.u32 %v188, 7
    %v190 = vsub.s32 0, %v189
    %v191 = vrot.slane %v186, %v190
    %v197 = vunpack.c.l.b16 %v182
    %v198 = vunpack.c.l.b16 %v183
    %v199 = vunpack.c.l.b16 %v184
    %v200 = vunpack.c.l.b16 %v185
    %v201 = vpack.c.b16 %v198, %v197
    %v202 = vpack.c.b16 %v200, %v199
    %v206 = vsel %vm136, %v181, 0
    %208 = vmatprep.subr.bf16.mxu0 0
    %209 = vmatpush1.bf16.msra.mxu0 %v201
    %210 = vmatprep.subr.bf16.mxu0 0
    %211 = vmatpush1.bf16.msra.mxu0 %v202
    %212 = vmatprep.subr.bf16.mxu0 0
    %213 = vmatpush1.bf16.msra.mxu0 0
    %214 = vmatprep.subr.bf16.mxu0 0
    %215 = vmatpush1.bf16.msra.mxu0 0
    %216 = vmatprep.subr.bf16.mxu0 0
    %217 = vmatpush1.bf16.msra.mxu0 0
    %218 = vmatprep.subr.bf16.mxu0 0
    %219 = vmatpush1.bf16.msra.mxu0 0
    %220 = vmatprep.subr.bf16.mxu0 0
    %221 = vmatpush1.bf16.msra.mxu0 0
    %222 = vmatprep.subr.bf16.mxu0 0
    %223 = vmatpush1.bf16.msra.mxu0 0
    %224 = vmatprep.subr.bf16.mxu0 0
    %225 = vmatpush1.bf16.msra.mxu0 0
    %226 = vmatprep.subr.bf16.mxu0 0
    %227 = vmatpush1.bf16.msra.mxu0 0
    %228 = vmatprep.subr.bf16.mxu0 0
    %229 = vmatpush1.bf16.msra.mxu0 0
    %230 = vmatprep.subr.bf16.mxu0 0
    %231 = vmatpush1.bf16.msra.mxu0 0
    %232 = vmatprep.subr.bf16.mxu0 0
    %233 = vmatpush1.bf16.msra.mxu0 0
    %234 = vmatprep.subr.bf16.mxu0 0
    %235 = vmatpush1.bf16.msra.mxu0 0
    %236 = vmatprep.subr.bf16.mxu0 0
    %237 = vmatpush1.bf16.msra.mxu0 0
    %238 = vmatprep.subr.bf16.mxu0 0
    %239 = vmatpush1.bf16.msra.mxu0 0
    %240 = vmatprep.mubr.bf16.mxu0 0
    %241 = vmatmul.mubr.bf16.gmra.mrb[0].mxu0 %v206
    %v242 = vpop.f32.mrb[0].mxu0
    %v243 = vadd.f32 %v191, %v242
    %v244 = vpop.f32.mrb[0].mxu0
    %v245 = vpop.f32.mrb[0].mxu0
    %v246 = vpop.f32.mrb[0].mxu0
    %247 = vdwg.mxu0
    %248 = vst [vmem:[#allocation2] sm:$0xff] %v243
    // Predicated region
    $region38: #{mlp_network_forward.1} parent=1 // pred_check
      _
    $region39: #{mlp_network_forward.1} parent=1 // pred_check_branch
      %250 = sbr.rel (0) target = $region41
    $region40: #{mlp_network_forward.1} parent=1 // pred_region
      %s252 = ssub.s32 128, 128
      %253 = vsyncadd [#allocation3], %s252
      %s255 = sshll.u32 [#allocation2], 4
      %s256 = int_to_ptr.vmem [resolvable:$true] %s255
      %258 = dma.vmem_to_hbm [thread:$0]  %s256, 128, %s9, [#allocation3]
    $region41: #{mlp_network_forward.1} parent=1 // pred_fallthru
      _
    // Predicated region
    $region42: #{mlp_network_forward.1} parent=1 // pred_check
      _
    $region43: #{mlp_network_forward.1} parent=1 // pred_check_branch
      %260 = sbr.rel (0) target = $region45
    $region44: #{mlp_network_forward.1} parent=1 // pred_region
      %261 = dma.done [#allocation3], 128
    $region45: #{mlp_network_forward.1} parent=1 // pred_fallthru
      _
    %262 = vsyncpa [#allocation3], 1

</llo_original>
